<compile_context>
chip_gen: v5e
topology: v5e:2x2
jax: 0.10.0
libtpu: 0.0.40
codegen_flags: <defaults>
</compile_context>

<pallas_src>
import math
import functools

import jax
import jax.numpy as jnp
from jax.experimental import pallas as pl
from jax.experimental.pallas import tpu as pltpu


LANES = 128
SUBLANES = 8
TILE_ROWS = 2048          # 2048 x 128 f32 = 1 MiB per block


def _l2norm_loss_kernel(x1_ref, x2_ref, x3_ref, o_ref, *, scale):
    # x*_ref / o_ref: (tile_rows, 128) VMEM tiles in the input dtype.
    # Accumulate in f32 (free under the memory roofline), store in out dtype.
    acc = (
        x1_ref[...].astype(jnp.float32)
        + x2_ref[...].astype(jnp.float32)
        + x3_ref[...].astype(jnp.float32)
    )
    o_ref[...] = (acc * scale).astype(o_ref.dtype)


def l2norm_loss(x1, x2, x3, length, loss_weight=0.0005):
    """Pallas implementation of L2NormLoss.forward.

    x1, x2, x3: arrays of identical shape/dtype (e.g. NCHW feature maps).
    length, loss_weight: Python scalars (as in the PyTorch module).
    """
    assert x1.shape == x2.shape == x3.shape
    assert x1.dtype == x2.dtype == x3.dtype
    orig_shape = x1.shape
    dtype = x1.dtype

    # Compile-time constant: loss_weight / (3 * sqrt(length)).
    scale = float(loss_weight) / (3.0 * math.sqrt(float(length)))

    # Lane-dense (rows, 128) slab; pad only if strictly necessary.
    n = x1.size
    rows = -(-n // LANES)                         # ceil(n / 128)
    rows = -(-rows // SUBLANES) * SUBLANES        # round up to multiple of 8
    padded = rows * LANES
    needs_pad = padded != n

    def to_slab(x):
        xf = x.reshape(-1)
        if needs_pad:
            xf = jnp.pad(xf, (0, padded - n))
        return xf.reshape(rows, LANES)

    x1s, x2s, x3s = to_slab(x1), to_slab(x2), to_slab(x3)

    tile_rows = min(TILE_ROWS, rows)              # rows is a multiple of 8
    grid = (pl.cdiv(rows, tile_rows),)

    kernel = functools.partial(_l2norm_loss_kernel, scale=scale)

    out = pl.pallas_call(
        kernel,
        out_shape=jax.ShapeDtypeStruct((rows, LANES), dtype),
        grid=grid,
        in_specs=[
            pl.BlockSpec((tile_rows, LANES), lambda i: (i, 0)),
            pl.BlockSpec((tile_rows, LANES), lambda i: (i, 0)),
            pl.BlockSpec((tile_rows, LANES), lambda i: (i, 0)),
        ],
        out_specs=pl.BlockSpec((tile_rows, LANES), lambda i: (i, 0)),
        compiler_params=pltpu.CompilerParams(
            dimension_semantics=("parallel",),
            vmem_limit_bytes=32 * 1024 * 1024,
        ),
    )(x1s, x2s, x3s)

    out = out.reshape(-1)
    if needs_pad:
        out = out[:n]
    return out.reshape(orig_shape)


if __name__ == "__main__":
    key = jax.random.PRNGKey(0)
    k1, k2, k3 = jax.random.split(key, 3)

    # Small NCHW-shaped inputs consistent with feature-map losses.
    shape = (2, 4, 16, 16)
    x1 = jax.random.normal(k1, shape, dtype=jnp.float32)
    x2 = jax.random.normal(k2, shape, dtype=jnp.float32)
    x3 = jax.random.normal(k3, shape, dtype=jnp.float32)
    length = 8          # python scalar, as in the PyTorch module
    loss_weight = 0.0005

    out = l2norm_loss(x1, x2, x3, length, loss_weight)
    out = jax.block_until_ready(out)

    # Reference (plain JAX) forward semantics.
    ref = loss_weight * ((x1 + x2 + x3) / 3.0) / math.sqrt(float(length))
    assert out.shape == ref.shape and out.dtype == ref.dtype
    assert jnp.allclose(out, ref, atol=1e-6, rtol=1e-6)

    print("KERNEL_OK")
</pallas_src>

<mosaic_0001>
module attributes {stable_mosaic.version = 11 : i64} {
  func.func @_l2norm_loss_kernel(%arg0: i32, %arg1: memref<16x128xf32, #tpu.memory_space<vmem>>, %arg2: memref<16x128xf32, #tpu.memory_space<vmem>>, %arg3: memref<16x128xf32, #tpu.memory_space<vmem>>, %arg4: memref<16x128xf32, #tpu.memory_space<vmem>>) attributes {dimension_semantics = [#tpu.dimension_semantics<parallel>], iteration_bounds = array<i64: 1>, scalar_prefetch = 0 : i64, scratch_operands = 0 : i64, tpu.core_type = #tpu.core_type<tc>, window_params = [{transform_indices = @transform_0, window_bounds = array<i64: 16, 128>}, {transform_indices = @transform_1, window_bounds = array<i64: 16, 128>}, {transform_indices = @transform_2, window_bounds = array<i64: 16, 128>}, {transform_indices = @transform_3, window_bounds = array<i64: 16, 128>}]} {
    %c0 = arith.constant 0 : index
    %c0_0 = arith.constant 0 : index
    %0 = vector.load %arg1[%c0, %c0_0] : memref<16x128xf32, #tpu.memory_space<vmem>>, vector<16x128xf32>
    %c0_1 = arith.constant 0 : index
    %c0_2 = arith.constant 0 : index
    %1 = vector.load %arg2[%c0_1, %c0_2] : memref<16x128xf32, #tpu.memory_space<vmem>>, vector<16x128xf32>
    %2 = arith.addf %0, %1 : vector<16x128xf32>
    %c0_3 = arith.constant 0 : index
    %c0_4 = arith.constant 0 : index
    %3 = vector.load %arg3[%c0_3, %c0_4] : memref<16x128xf32, #tpu.memory_space<vmem>>, vector<16x128xf32>
    %4 = arith.addf %2, %3 : vector<16x128xf32>
    %cst = arith.constant 5.89255651E-5 : f32
    %5 = vector.broadcast %cst : f32 to vector<16x128xf32>
    %6 = arith.mulf %4, %5 : vector<16x128xf32>
    %c0_5 = arith.constant 0 : index
    %c0_6 = arith.constant 0 : index
    %7 = vector.load %arg4[%c0_5, %c0_6] : memref<16x128xf32, #tpu.memory_space<vmem>>, vector<16x128xf32>
    tpu.vector_store %arg4[%c0_5, %c0_6], %6 {strides = array<i32>} : memref<16x128xf32, #tpu.memory_space<vmem>>, vector<16x128xf32>,
    return
  }
  func.func @transform_0(%arg0: i32) -> (i32, i32) {
    %c0_i32 = arith.constant 0 : i32
    %c0_i32_0 = arith.constant 0 : i32
    return %arg0, %c0_i32 : i32, i32
  }
  func.func @transform_1(%arg0: i32) -> (i32, i32) {
    %c0_i32 = arith.constant 0 : i32
    %c0_i32_0 = arith.constant 0 : i32
    return %arg0, %c0_i32 : i32, i32
  }
  func.func @transform_2(%arg0: i32) -> (i32, i32) {
    %c0_i32 = arith.constant 0 : i32
    %c0_i32_0 = arith.constant 0 : i32
    return %arg0, %c0_i32 : i32, i32
  }
  func.func @transform_3(%arg0: i32) -> (i32, i32) {
    %c0_i32 = arith.constant 0 : i32
    %c0_i32_0 = arith.constant 0 : i32
    return %arg0, %c0_i32 : i32, i32
  }
}

</mosaic_0001>

<llo_original>
// kernel: tpu_custom_call.1
$region0: #{tpu_custom_call.1}
  #allocation0 [shape = 'u32[]', space=smem, size = 0x4, offset = 0x4, fixed_abs, tag = 'smem constant byte address 0x4 - core index']
  #allocation1 [shape = 'u32[72,128]{1,0:T(1,128)}', space=vmem, size = 0x9000, scoped, tag = 'internal scratch']
  %s0 = inlined_call_operand.hbm [shape: f32[16,128], index: 0, kind: input, shape index: {}]
  %s1 = inlined_call_operand.hbm [shape: f32[16,128], index: 1, kind: input, shape index: {}]
  %s2 = inlined_call_operand.hbm [shape: f32[16,128], index: 2, kind: input, shape index: {}]
  %s3 = inlined_call_operand.hbm [shape: f32[16,128], index: 3, kind: output, shape index: {}]
  %s4 = sld [smem:[#allocation0]]
  $region34: #{tpu_custom_call.1} parent=0
    _
  %s6 = ssub.s32 1, %s4
  %s7 = scalar_select 0, %s6, %s4
  $region1: #{tpu_custom_call.1} parent=0
    #allocation2 [shape = 'u8[8192]{0}', space=vmem, size = 0x2000, scoped, tag = 'input window, operand 0, single buffered']
    #allocation3 [shape = 's32[1]{0}', space=sflag, size = 0x4, scoped, tag = 'scoped memory for tpu_custom_call.1']
    #allocation4 [shape = 's32[1]{0}', space=sflag, size = 0x4, scoped, tag = 'scoped memory for tpu_custom_call.1']
    #allocation5 [shape = 'u8[8192]{0}', space=vmem, size = 0x2000, scoped, tag = 'input window, operand 1, single buffered']
    #allocation6 [shape = 's32[1]{0}', space=sflag, size = 0x4, scoped, tag = 'scoped memory for tpu_custom_call.1']
    #allocation7 [shape = 'u8[8192]{0}', space=vmem, size = 0x2000, scoped, tag = 'input window, operand 2, single buffered']
    #allocation8 [shape = 'u8[8192]{0}', space=vmem, size = 0x2000, scoped, tag = 'output window, operand 0, single buffered']
    %8 = vsyncpa [#allocation3], 0
    %9 = vsyncpa [#allocation6], 0
    %10 = vsyncpa [#allocation4], 0
    // Predicated region
    $region2: #{tpu_custom_call.1} parent=1 // pred_check
      _
    $region3: #{tpu_custom_call.1} parent=1 // pred_check_branch
      %12 = sbr.rel (0) target = $region5
    $region4: #{tpu_custom_call.1} parent=1 // pred_region
      %14 = vsyncadd [#allocation3], 0
      %s15 = sshll.u32 %s0, 4
      %s16 = int_to_ptr.hbm [resolvable:$true] %s15
      %s17 = sshll.u32 [#allocation2], 4
      %s18 = int_to_ptr.vmem [resolvable:$true] %s17
      %23 = dma.hbm_to_vmem [thread:$0]  %s16, 256, %s18, [#allocation3], 128, 128, 8
    $region5: #{tpu_custom_call.1} parent=1 // pred_fallthru
      _
    // Predicated region
    $region6: #{tpu_custom_call.1} parent=1 // pred_check
      _
    $region7: #{tpu_custom_call.1} parent=1 // pred_check_branch
      %25 = sbr.rel (0) target = $region9
    $region8: #{tpu_custom_call.1} parent=1 // pred_region
      %27 = vsyncadd [#allocation6], 0
      %s28 = sshll.u32 %s1, 4
      %s29 = int_to_ptr.hbm [resolvable:$true] %s28
      %s30 = sshll.u32 [#allocation5], 4
      %s31 = int_to_ptr.vmem [resolvable:$true] %s30
      %36 = dma.hbm_to_vmem [thread:$0]  %s29, 256, %s31, [#allocation6], 128, 128, 8
    $region9: #{tpu_custom_call.1} parent=1 // pred_fallthru
      _
    // Predicated region
    $region10: #{tpu_custom_call.1} parent=1 // pred_check
      _
    $region11: #{tpu_custom_call.1} parent=1 // pred_check_branch
      %38 = sbr.rel (0) target = $region13
    $region12: #{tpu_custom_call.1} parent=1 // pred_region
      %40 = vsyncadd [#allocation6], 0
      %s41 = sshll.u32 %s2, 4
      %s42 = int_to_ptr.hbm [resolvable:$true] %s41
      %s43 = sshll.u32 [#allocation7], 4
      %s44 = int_to_ptr.vmem [resolvable:$true] %s43
      %49 = dma.hbm_to_vmem [thread:$0]  %s42, 256, %s44, [#allocation6], 128, 128, 8
    $region13: #{tpu_custom_call.1} parent=1 // pred_fallthru
      _
    // Predicated region
    $region14: #{tpu_custom_call.1} parent=1 // pred_check
      _
    $region15: #{tpu_custom_call.1} parent=1 // pred_check_branch
      %51 = sbr.rel (0) target = $region17
    $region16: #{tpu_custom_call.1} parent=1 // pred_region
      %53 = dma.done [#allocation3], 256
    $region17: #{tpu_custom_call.1} parent=1 // pred_fallthru
      _
    // Predicated region
    $region18: #{tpu_custom_call.1} parent=1 // pred_check
      _
    $region19: #{tpu_custom_call.1} parent=1 // pred_check_branch
      %55 = sbr.rel (0) target = $region21
    $region20: #{tpu_custom_call.1} parent=1 // pred_region
      %57 = dma.done [#allocation6], 256
    $region21: #{tpu_custom_call.1} parent=1 // pred_fallthru
      _
    // Predicated region
    $region22: #{tpu_custom_call.1} parent=1 // pred_check
      _
    $region23: #{tpu_custom_call.1} parent=1 // pred_check_branch
      %59 = sbr.rel (0) target = $region25
    $region24: #{tpu_custom_call.1} parent=1 // pred_region
      %61 = dma.done [#allocation6], 256
    $region25: #{tpu_custom_call.1} parent=1 // pred_fallthru
      _
    %v62 = vld [vmem:[#allocation2] sm:$0xff]
    %v63 = vld [vmem:[#allocation2 + $0x8] sm:$0xff]
    %v64 = vld [vmem:[#allocation5] sm:$0xff]
    %v65 = vld [vmem:[#allocation5 + $0x8] sm:$0xff]
    %v66 = vadd.f32 %v62, %v64
    %v67 = vadd.f32 %v63, %v65
    %v68 = vld [vmem:[#allocation7] sm:$0xff]
    %v69 = vld [vmem:[#allocation7 + $0x8] sm:$0xff]
    %v70 = vadd.f32 %v66, %v68
    %v71 = vadd.f32 %v67, %v69
    %v72 = vmul.f32 %v70, 5.8925565e-05
    %v73 = vmul.f32 %v71, 5.8925565e-05
    %74 = vst [vmem:[#allocation8] sm:$0xff] %v72
    %75 = vst [vmem:[#allocation8 + $0x8] sm:$0xff] %v73
    // Predicated region
    $region26: #{tpu_custom_call.1} parent=1 // pred_check
      _
    $region27: #{tpu_custom_call.1} parent=1 // pred_check_branch
      %77 = sbr.rel (0) target = $region29
    $region28: #{tpu_custom_call.1} parent=1 // pred_region
      %79 = vsyncadd [#allocation4], 0
      %s80 = sshll.u32 [#allocation8], 4
      %s81 = int_to_ptr.vmem [resolvable:$true] %s80
      %s82 = sshll.u32 %s3, 4
      %s83 = int_to_ptr.hbm [resolvable:$true] %s82
      %88 = dma.vmem_to_hbm [thread:$0]  %s81, 256, %s83, [#allocation4], 128, 128, 8
    $region29: #{tpu_custom_call.1} parent=1 // pred_fallthru
      _
    // Predicated region
    $region30: #{tpu_custom_call.1} parent=1 // pred_check
      _
    $region31: #{tpu_custom_call.1} parent=1 // pred_check_branch
      %90 = sbr.rel (0) target = $region33
    $region32: #{tpu_custom_call.1} parent=1 // pred_region
      %92 = dma.done [#allocation4], 256
    $region33: #{tpu_custom_call.1} parent=1 // pred_fallthru
      _
    %93 = vsyncpa [#allocation3], 1
    %94 = vsyncpa [#allocation6], 1
    %95 = vsyncpa [#allocation4], 1

</llo_original>
